<compile_context>
chip_gen: v7x
topology: tpu7x:2x2x1
jax: 0.10.0
libtpu: 0.0.40
codegen_flags: <defaults>
</compile_context>

<pallas_src>
import jax
import jax.numpy as jnp
from jax.experimental import pallas as pl
from jax.experimental.pallas import tpu as pltpu

BN_EPS = 1e-5
LANE = 128


def _round_up(n, m):
    return (n + m - 1) // m * m


# ----------------------------------------------------------------------------- kernel
def _make_kernel(in_size, w_pad):
    """Build the fused QNetwork forward kernel for the packed-parameter layout."""

    def kernel(x_ref, w_ref, v_ref, out_ref):
        mm_dtype = w_ref.dtype          # f32, or bf16 for the MXU-operand fast path
        x = x_ref[...]

        # Static, sublane/lane-aligned slices of the packed weight buffer.
        w1 = w_ref[0:in_size, :]                              # [IN, W]
        w2 = w_ref[in_size:in_size + w_pad, :]                # [W,  W]
        wo = w_ref[in_size + w_pad:in_size + 2 * w_pad, :]    # [W,  W]

        g1 = v_ref[0:1, :]
        beta1 = v_ref[1:2, :]
        g2 = v_ref[2:3, :]
        beta2 = v_ref[3:4, :]
        bo = v_ref[4:5, :]

        def bn_relu(h, gamma, beta):
            # Training-mode BatchNorm1d (biased variance), fused into one FMA:
            #   scale = gamma * rsqrt(var + eps);  shift = beta - mean * scale
            mean = jnp.mean(h, axis=0, keepdims=True)
            var = jnp.maximum(
                jnp.mean(h * h, axis=0, keepdims=True) - mean * mean, 0.0)
            scale = gamma * jax.lax.rsqrt(var + BN_EPS)   # [1, W]
            shift = beta - mean * scale                   # [1, W]
            return jnp.maximum(h * scale + shift, 0.0)

        # Hidden layer 1. Linear bias omitted on purpose (cancelled by BN mean).
        h = jnp.dot(x.astype(mm_dtype), w1, preferred_element_type=jnp.float32)
        h = bn_relu(h, g1, beta1)

        # Hidden layer 2 (bias likewise cancelled).
        h = jnp.dot(h.astype(mm_dtype), w2, preferred_element_type=jnp.float32)
        h = bn_relu(h, g2, beta2)

        # Output layer (bias kept). Output padded to 128 lanes -> unmasked stores.
        out_ref[...] = (jnp.dot(h.astype(mm_dtype), wo,
                                preferred_element_type=jnp.float32) + bo)

    return kernel


# ------------------------------------------------------------------------ param packing
def pack_params(params, *, matmul_dtype=jnp.float32):
    """Concatenate all parameters into two lane-dense contiguous buffers.

    wbuf: [IN + 2*W, W]  zero-padded stack (w1 | w2 | wo), dtype = matmul_dtype
          (bf16 halves weight DMA bytes and feeds the bf16 MXU on v6e/v7x).
    vbuf: [8, W] f32, rows = (gamma1, beta1, gamma2, beta2, out_bias, 0, 0, 0).
    Hidden Linear biases b1/b2 are intentionally NOT packed: with training-mode
    BatchNorm right after the Linear they are cancelled by the mean subtraction.
    """
    w1, w2, wo = params["w1"], params["w2"], params["wo"]
    in_size, h1 = w1.shape
    h2 = w2.shape[1]
    out_size = wo.shape[1]
    W = _round_up(max(h1, h2, out_size, LANE), LANE)

    wbuf = jnp.zeros((in_size + 2 * W, W), matmul_dtype)
    wbuf = wbuf.at[0:in_size, 0:h1].set(w1.astype(matmul_dtype))
    wbuf = wbuf.at[in_size:in_size + h1, 0:h2].set(w2.astype(matmul_dtype))
    wbuf = wbuf.at[in_size + W:in_size + W + h2, 0:out_size].set(
        wo.astype(matmul_dtype))

    vbuf = jnp.zeros((8, W), jnp.float32)
    vbuf = vbuf.at[0, 0:h1].set(params["g1"].reshape(-1))
    vbuf = vbuf.at[1, 0:h1].set(params["beta1"].reshape(-1))
    vbuf = vbuf.at[2, 0:h2].set(params["g2"].reshape(-1))
    vbuf = vbuf.at[3, 0:h2].set(params["beta2"].reshape(-1))
    vbuf = vbuf.at[4, 0:out_size].set(params["bo"].reshape(-1))

    return {"wbuf": wbuf, "vbuf": vbuf,
            "in": in_size, "h1": h1, "h2": h2, "out": out_size, "W": W}


# ----------------------------------------------------------------------------- wrapper
def qnetwork_forward(x, packed):
    """x: [B, input_size] f32.  packed: output of pack_params()."""
    B = x.shape[0]
    in_size, out_size, W = packed["in"], packed["out"], packed["W"]
    wbuf, vbuf = packed["wbuf"], packed["vbuf"]

    flops = 2 * B * (in_size * W + 2 * W * W)
    bytes_accessed = int(
        x.size * 4
        + wbuf.size * jnp.dtype(wbuf.dtype).itemsize
        + vbuf.size * 4
        + B * W * 4)

    out_padded = pl.pallas_call(
        _make_kernel(in_size, W),
        out_shape=jax.ShapeDtypeStruct((B, W), jnp.float32),
        in_specs=[pl.BlockSpec(memory_space=pltpu.MemorySpace.VMEM)] * 3,
        out_specs=pl.BlockSpec(memory_space=pltpu.MemorySpace.VMEM),
        cost_estimate=pl.CostEstimate(flops=flops,
                                      transcendentals=2 * W,
                                      bytes_accessed=bytes_accessed),
    )(x, wbuf, vbuf)
    return out_padded[:, :out_size]


# ------------------------------------------------------------------------- init / ref
def init_params(key, input_size, hidden_size, output_size):
    """PyTorch-style init: Linear ~ U(-1/sqrt(fan_in), 1/sqrt(fan_in)); BN gamma=1, beta=0."""
    h1, h2 = hidden_size
    keys = jax.random.split(key, 6)

    def linear(kw, kb, fan_in, fan_out):
        bound = 1.0 / jnp.sqrt(fan_in)
        w = jax.random.uniform(kw, (fan_in, fan_out), jnp.float32, -bound, bound)
        b = jax.random.uniform(kb, (1, fan_out), jnp.float32, -bound, bound)
        return w, b

    w1, b1 = linear(keys[0], keys[1], input_size, h1)
    w2, b2 = linear(keys[2], keys[3], h1, h2)
    wo, bo = linear(keys[4], keys[5], h2, output_size)

    return {
        "w1": w1, "b1": b1,
        "g1": jnp.ones((1, h1), jnp.float32), "beta1": jnp.zeros((1, h1), jnp.float32),
        "w2": w2, "b2": b2,
        "g2": jnp.ones((1, h2), jnp.float32), "beta2": jnp.zeros((1, h2), jnp.float32),
        "wo": wo, "bo": bo,
    }


def _reference_forward(x, p):
    """Pure-JAX reference with the *original* semantics (biases included,
    training-mode BatchNorm1d). Proves the bias-cancellation is exact."""
    h = x @ p["w1"] + p["b1"]
    m = h.mean(0, keepdims=True)
    v = ((h - m) ** 2).mean(0, keepdims=True)
    h = jnp.maximum((h - m) / jnp.sqrt(v + BN_EPS) * p["g1"] + p["beta1"], 0.0)
    h = h @ p["w2"] + p["b2"]
    m = h.mean(0, keepdims=True)
    v = ((h - m) ** 2).mean(0, keepdims=True)
    h = jnp.maximum((h - m) / jnp.sqrt(v + BN_EPS) * p["g2"] + p["beta2"], 0.0)
    return h @ p["wo"] + p["bo"]


# --------------------------------------------------------------------------------- main
if __name__ == "__main__":
    input_size = 32
    hidden_size = [64, 64]
    output_size = 16
    batch = 8

    key = jax.random.PRNGKey(0)
    kx, kp = jax.random.split(key)
    x = jax.random.normal(kx, (batch, input_size), jnp.float32)
    params = init_params(kp, input_size, hidden_size, output_size)

    ref = _reference_forward(x, params)

    # f32-operand path (exact match vs. reference; also the right elementwise dtype on v5e).
    packed_f32 = pack_params(params, matmul_dtype=jnp.float32)
    out = jax.block_until_ready(qnetwork_forward(x, packed_f32))
    assert out.shape == (batch, output_size)
    assert jnp.allclose(out, ref, atol=1e-4, rtol=1e-4), "f32 kernel mismatch vs reference"

    # bf16 MXU-operand path (v6e/v7x lever): f32 accumulation, f32 BN/ReLU elementwise.
    packed_bf16 = pack_params(params, matmul_dtype=jnp.bfloat16)
    out_bf16 = jax.block_until_ready(qnetwork_forward(x, packed_bf16))
    assert out_bf16.shape == (batch, output_size)
    assert bool(jnp.all(jnp.isfinite(out_bf16)))
    assert float(jnp.max(jnp.abs(out_bf16 - ref))) < 0.5, "bf16 kernel grossly off"

    print("KERNEL_OK")
</pallas_src>

<mosaic_0001>
module attributes {stable_mosaic.version = 11 : i64} {
  func.func @kernel(%arg0: memref<8x32xf32, #tpu.memory_space<vmem>>, %arg1: memref<288x128xf32, #tpu.memory_space<vmem>>, %arg2: memref<8x128xf32, #tpu.memory_space<vmem>>, %arg3: memref<8x128xf32, #tpu.memory_space<vmem>>) attributes {dimension_semantics = [], scalar_prefetch = 0 : i64, scratch_operands = 0 : i64, tpu.core_type = #tpu.core_type<tc>} {
    %c0 = arith.constant 0 : index
    %c0_0 = arith.constant 0 : index
    %0 = vector.load %arg0[%c0, %c0_0] : memref<8x32xf32, #tpu.memory_space<vmem>>, vector<8x32xf32>
    %c0_1 = arith.constant 0 : index
    %c0_2 = arith.constant 0 : index
    %1 = vector.load %arg1[%c0_1, %c0_2] : memref<288x128xf32, #tpu.memory_space<vmem>>, vector<32x128xf32>
    %c32 = arith.constant 32 : index
    %c0_3 = arith.constant 0 : index
    %2 = vector.load %arg1[%c32, %c0_3] : memref<288x128xf32, #tpu.memory_space<vmem>>, vector<128x128xf32>
    %c160 = arith.constant 160 : index
    %c0_4 = arith.constant 0 : index
    %3 = vector.load %arg1[%c160, %c0_4] : memref<288x128xf32, #tpu.memory_space<vmem>>, vector<128x128xf32>
    %c0_5 = arith.constant 0 : index
    %c0_6 = arith.constant 0 : index
    %4 = vector.load %arg2[%c0_5, %c0_6] : memref<8x128xf32, #tpu.memory_space<vmem>>, vector<1x128xf32>
    %c1 = arith.constant 1 : index
    %c0_7 = arith.constant 0 : index
    %5 = vector.load %arg2[%c1, %c0_7] : memref<8x128xf32, #tpu.memory_space<vmem>>, vector<1x128xf32>
    %c2 = arith.constant 2 : index
    %c0_8 = arith.constant 0 : index
    %6 = vector.load %arg2[%c2, %c0_8] : memref<8x128xf32, #tpu.memory_space<vmem>>, vector<1x128xf32>
    %c3 = arith.constant 3 : index
    %c0_9 = arith.constant 0 : index
    %7 = vector.load %arg2[%c3, %c0_9] : memref<8x128xf32, #tpu.memory_space<vmem>>, vector<1x128xf32>
    %c4 = arith.constant 4 : index
    %c0_10 = arith.constant 0 : index
    %8 = vector.load %arg2[%c4, %c0_10] : memref<8x128xf32, #tpu.memory_space<vmem>>, vector<1x128xf32>
    %cst = arith.constant dense<0.000000e+00> : vector<8x128xf32>
    %9 = tpu.matmul %0, %1, %cst {dimension_numbers = #tpu.dot_dimension_numbers<[1], [0], [0], [1], [0, 0, 1, 1], [], []>} : vector<8x32xf32>, vector<32x128xf32>, vector<8x128xf32> -> vector<8x128xf32>
    %cst_11 = arith.constant dense<0.000000e+00> : vector<128xf32>
    %10 = vector.multi_reduction <add>, %9, %cst_11 [0] : vector<8x128xf32> to vector<128xf32>
    %11 = vector.shape_cast %10 : vector<128xf32> to vector<1x128xf32>
    %cst_12 = arith.constant 8.000000e+00 : f32
    %12 = vector.broadcast %cst_12 : f32 to vector<1x128xf32>
    %13 = arith.divf %11, %12 : vector<1x128xf32>
    %14 = arith.mulf %9, %9 : vector<8x128xf32>
    %cst_13 = arith.constant dense<0.000000e+00> : vector<128xf32>
    %15 = vector.multi_reduction <add>, %14, %cst_13 [0] : vector<8x128xf32> to vector<128xf32>
    %16 = vector.shape_cast %15 : vector<128xf32> to vector<1x128xf32>
    %cst_14 = arith.constant 8.000000e+00 : f32
    %17 = vector.broadcast %cst_14 : f32 to vector<1x128xf32>
    %18 = arith.divf %16, %17 : vector<1x128xf32>
    %19 = arith.mulf %13, %13 : vector<1x128xf32>
    %20 = arith.subf %18, %19 : vector<1x128xf32>
    %cst_15 = arith.constant 0.000000e+00 : f32
    %21 = vector.broadcast %cst_15 : f32 to vector<1x128xf32>
    %22 = arith.maximumf %20, %21 : vector<1x128xf32>
    %cst_16 = arith.constant 9.99999974E-6 : f32
    %23 = vector.broadcast %cst_16 : f32 to vector<1x128xf32>
    %24 = arith.addf %22, %23 : vector<1x128xf32>
    %25 = math.rsqrt %24 : vector<1x128xf32>
    %26 = arith.mulf %4, %25 : vector<1x128xf32>
    %27 = arith.mulf %13, %26 : vector<1x128xf32>
    %28 = arith.subf %5, %27 : vector<1x128xf32>
    %29 = vector.broadcast %26 : vector<1x128xf32> to vector<8x128xf32>
    %30 = arith.mulf %9, %29 : vector<8x128xf32>
    %31 = vector.broadcast %28 : vector<1x128xf32> to vector<8x128xf32>
    %32 = arith.addf %30, %31 : vector<8x128xf32>
    %cst_17 = arith.constant 0.000000e+00 : f32
    %33 = vector.broadcast %cst_17 : f32 to vector<8x128xf32>
    %34 = arith.maximumf %32, %33 : vector<8x128xf32>
    %cst_18 = arith.constant dense<0.000000e+00> : vector<8x128xf32>
    %35 = tpu.matmul %34, %2, %cst_18 {dimension_numbers = #tpu.dot_dimension_numbers<[1], [0], [0], [1], [0, 0, 1, 1], [], []>} : vector<8x128xf32>, vector<128x128xf32>, vector<8x128xf32> -> vector<8x128xf32>
    %cst_19 = arith.constant dense<0.000000e+00> : vector<128xf32>
    %36 = vector.multi_reduction <add>, %35, %cst_19 [0] : vector<8x128xf32> to vector<128xf32>
    %37 = vector.shape_cast %36 : vector<128xf32> to vector<1x128xf32>
    %cst_20 = arith.constant 8.000000e+00 : f32
    %38 = vector.broadcast %cst_20 : f32 to vector<1x128xf32>
    %39 = arith.divf %37, %38 : vector<1x128xf32>
    %40 = arith.mulf %35, %35 : vector<8x128xf32>
    %cst_21 = arith.constant dense<0.000000e+00> : vector<128xf32>
    %41 = vector.multi_reduction <add>, %40, %cst_21 [0] : vector<8x128xf32> to vector<128xf32>
    %42 = vector.shape_cast %41 : vector<128xf32> to vector<1x128xf32>
    %cst_22 = arith.constant 8.000000e+00 : f32
    %43 = vector.broadcast %cst_22 : f32 to vector<1x128xf32>
    %44 = arith.divf %42, %43 : vector<1x128xf32>
    %45 = arith.mulf %39, %39 : vector<1x128xf32>
    %46 = arith.subf %44, %45 : vector<1x128xf32>
    %cst_23 = arith.constant 0.000000e+00 : f32
    %47 = vector.broadcast %cst_23 : f32 to vector<1x128xf32>
    %48 = arith.maximumf %46, %47 : vector<1x128xf32>
    %cst_24 = arith.constant 9.99999974E-6 : f32
    %49 = vector.broadcast %cst_24 : f32 to vector<1x128xf32>
    %50 = arith.addf %48, %49 : vector<1x128xf32>
    %51 = math.rsqrt %50 : vector<1x128xf32>
    %52 = arith.mulf %6, %51 : vector<1x128xf32>
    %53 = arith.mulf %39, %52 : vector<1x128xf32>
    %54 = arith.subf %7, %53 : vector<1x128xf32>
    %55 = vector.broadcast %52 : vector<1x128xf32> to vector<8x128xf32>
    %56 = arith.mulf %35, %55 : vector<8x128xf32>
    %57 = vector.broadcast %54 : vector<1x128xf32> to vector<8x128xf32>
    %58 = arith.addf %56, %57 : vector<8x128xf32>
    %cst_25 = arith.constant 0.000000e+00 : f32
    %59 = vector.broadcast %cst_25 : f32 to vector<8x128xf32>
    %60 = arith.maximumf %58, %59 : vector<8x128xf32>
    %cst_26 = arith.constant dense<0.000000e+00> : vector<8x128xf32>
    %61 = tpu.matmul %60, %3, %cst_26 {dimension_numbers = #tpu.dot_dimension_numbers<[1], [0], [0], [1], [0, 0, 1, 1], [], []>} : vector<8x128xf32>, vector<128x128xf32>, vector<8x128xf32> -> vector<8x128xf32>
    %62 = vector.broadcast %8 : vector<1x128xf32> to vector<8x128xf32>
    %63 = arith.addf %61, %62 : vector<8x128xf32>
    %c0_27 = arith.constant 0 : index
    %c0_28 = arith.constant 0 : index
    %64 = vector.load %arg3[%c0_27, %c0_28] : memref<8x128xf32, #tpu.memory_space<vmem>>, vector<8x128xf32>
    tpu.vector_store %arg3[%c0_27, %c0_28], %63 {strides = array<i32>} : memref<8x128xf32, #tpu.memory_space<vmem>>, vector<8x128xf32>,
    return
  }
}

</mosaic_0001>

<llo_original>
// kernel: tpu_custom_call.1
$region0: #{tpu_custom_call.1}
  #allocation0 [shape = 'u32[]', space=smem, size = 0x4, offset = 0x4, fixed_abs, tag = 'smem constant byte address 0x4 - core index']
  #allocation1 [shape = 'u32[144,128]{1,0:T(1,128)}', space=vmem, size = 0x12000, scoped, tag = 'internal scratch']
  %s0 = inlined_call_operand.hbm [shape: f32[8,32], index: 0, kind: input, shape index: {}]
  %s1 = inlined_call_operand.hbm [shape: f32[288,128], index: 1, kind: input, shape index: {}]
  %s2 = inlined_call_operand.hbm [shape: f32[8,128], index: 2, kind: input, shape index: {}]
  %s3 = inlined_call_operand.hbm [shape: f32[8,128], index: 3, kind: output, shape index: {}]
  %s4 = sld [smem:[#allocation0]]
  $region34: #{tpu_custom_call.1} parent=0
    _
  %s6 = ssub.s32 1, %s4
  %s7 = scalar_select 0, %s6, %s4
  $region1: #{tpu_custom_call.1} parent=0
    #allocation2 [shape = 'u8[4096]{0}', space=vmem, size = 0x1000, scoped, tag = 'input window, operand 0, single buffered']
    #allocation3 [shape = 's32[1]{0}', space=sflag, size = 0x4, scoped, tag = 'scoped memory for tpu_custom_call.1']
    #allocation4 [shape = 's32[1]{0}', space=sflag, size = 0x4, scoped, tag = 'scoped memory for tpu_custom_call.1']
    #allocation5 [shape = 'u8[147456]{0}', space=vmem, size = 0x24000, scoped, tag = 'input window, operand 1, single buffered']
    #allocation6 [shape = 's32[1]{0}', space=sflag, size = 0x4, scoped, tag = 'scoped memory for tpu_custom_call.1']
    #allocation7 [shape = 'u8[4096]{0}', space=vmem, size = 0x1000, scoped, tag = 'input window, operand 2, single buffered']
    #allocation8 [shape = 'u8[4096]{0}', space=vmem, size = 0x1000, scoped, tag = 'output window, operand 0, single buffered']
    %8 = vsyncpa [#allocation3], 0
    %9 = vsyncpa [#allocation6], 0
    %10 = vsyncpa [#allocation4], 0
    // Predicated region
    $region2: #{tpu_custom_call.1} parent=1 // pred_check
      _
    $region3: #{tpu_custom_call.1} parent=1 // pred_check_branch
      %12 = sbr.rel (0) target = $region5
    $region4: #{tpu_custom_call.1} parent=1 // pred_region
      %s14 = ssub.s32 128, 128
      %15 = vsyncadd [#allocation3], %s14
      %s17 = sshll.u32 [#allocation2], 4
      %s18 = int_to_ptr.vmem [resolvable:$true] %s17
      %20 = dma.hbm_to_vmem [thread:$0]  %s0, 128, %s18, [#allocation3]
    $region5: #{tpu_custom_call.1} parent=1 // pred_fallthru
      _
    // Predicated region
    $region6: #{tpu_custom_call.1} parent=1 // pred_check
      _
    $region7: #{tpu_custom_call.1} parent=1 // pred_check_branch
      %22 = sbr.rel (0) target = $region9
    $region8: #{tpu_custom_call.1} parent=1 // pred_region
      %s24 = ssub.s32 4608, 4608
      %25 = vsyncadd [#allocation6], %s24
      %s26 = sshll.u32 [#allocation5], 4
      %s27 = int_to_ptr.vmem [resolvable:$true] %s26
      %32 = dma.hbm_to_vmem [thread:$0]  %s1, 4608, %s27, [#allocation6], 128, 128, 8
    $region9: #{tpu_custom_call.1} parent=1 // pred_fallthru
      _
    // Predicated region
    $region10: #{tpu_custom_call.1} parent=1 // pred_check
      _
    $region11: #{tpu_custom_call.1} parent=1 // pred_check_branch
      %34 = sbr.rel (0) target = $region13
    $region12: #{tpu_custom_call.1} parent=1 // pred_region
      %s36 = ssub.s32 128, 128
      %37 = vsyncadd [#allocation6], %s36
      %s39 = sshll.u32 [#allocation7], 4
      %s40 = int_to_ptr.vmem [resolvable:$true] %s39
      %42 = dma.hbm_to_vmem [thread:$0]  %s2, 128, %s40, [#allocation6]
    $region13: #{tpu_custom_call.1} parent=1 // pred_fallthru
      _
    // Predicated region
    $region14: #{tpu_custom_call.1} parent=1 // pred_check
      _
    $region15: #{tpu_custom_call.1} parent=1 // pred_check_branch
      %44 = sbr.rel (0) target = $region17
    $region16: #{tpu_custom_call.1} parent=1 // pred_region
      %45 = dma.done [#allocation3], 128
    $region17: #{tpu_custom_call.1} parent=1 // pred_fallthru
      _
    // Predicated region
    $region18: #{tpu_custom_call.1} parent=1 // pred_check
      _
    $region19: #{tpu_custom_call.1} parent=1 // pred_check_branch
      %47 = sbr.rel (0) target = $region21
    $region20: #{tpu_custom_call.1} parent=1 // pred_region
      %48 = dma.done [#allocation6], 4608
    $region21: #{tpu_custom_call.1} parent=1 // pred_fallthru
      _
    // Predicated region
    $region22: #{tpu_custom_call.1} parent=1 // pred_check
      _
    $region23: #{tpu_custom_call.1} parent=1 // pred_check_branch
      %50 = sbr.rel (0) target = $region25
    $region24: #{tpu_custom_call.1} parent=1 // pred_region
      %51 = dma.done [#allocation6], 128
    $region25: #{tpu_custom_call.1} parent=1 // pred_fallthru
      _
    %v52 = vld [vmem:[#allocation2] sm:$0xff]
    %v53 = vld [vmem:[#allocation5] sm:$0xff]
    %v54 = vld [vmem:[#allocation5 + $0x8] sm:$0xff]
    %v55 = vld [vmem:[#allocation5 + $0x10] sm:$0xff]
    %v56 = vld [vmem:[#allocation5 + $0x18] sm:$0xff]
    %v57 = vld [vmem:[#allocation5 + $0x20] sm:$0xff]
    %v58 = vld [vmem:[#allocation5 + $0x28] sm:$0xff]
    %v59 = vld [vmem:[#allocation5 + $0x30] sm:$0xff]
    %v60 = vld [vmem:[#allocation5 + $0x38] sm:$0xff]
    %v61 = vld [vmem:[#allocation5 + $0x40] sm:$0xff]
    %v62 = vld [vmem:[#allocation5 + $0x48] sm:$0xff]
    %v63 = vld [vmem:[#allocation5 + $0x50] sm:$0xff]
    %v64 = vld [vmem:[#allocation5 + $0x58] sm:$0xff]
    %v65 = vld [vmem:[#allocation5 + $0x60] sm:$0xff]
    %v66 = vld [vmem:[#allocation5 + $0x68] sm:$0xff]
    %v67 = vld [vmem:[#allocation5 + $0x70] sm:$0xff]
    %v68 = vld [vmem:[#allocation5 + $0x78] sm:$0xff]
    %v69 = vld [vmem:[#allocation5 + $0x80] sm:$0xff]
    %v70 = vld [vmem:[#allocation5 + $0x88] sm:$0xff]
    %v71 = vld [vmem:[#allocation5 + $0x90] sm:$0xff]
    %v72 = vld [vmem:[#allocation5 + $0x98] sm:$0xff]
    %v73 = vld [vmem:[#allocation5 + $0xa0] sm:$0xff]
    %v74 = vld [vmem:[#allocation5 + $0xa8] sm:$0xff]
    %v75 = vld [vmem:[#allocation5 + $0xb0] sm:$0xff]
    %v76 = vld [vmem:[#allocation5 + $0xb8] sm:$0xff]
    %v77 = vld [vmem:[#allocation5 + $0xc0] sm:$0xff]
    %v78 = vld [vmem:[#allocation5 + $0xc8] sm:$0xff]
    %v79 = vld [vmem:[#allocation5 + $0xd0] sm:$0xff]
    %v80 = vld [vmem:[#allocation5 + $0xd8] sm:$0xff]
    %v81 = vld [vmem:[#allocation5 + $0xe0] sm:$0xff]
    %v82 = vld [vmem:[#allocation5 + $0xe8] sm:$0xff]
    %v83 = vld [vmem:[#allocation5 + $0xf0] sm:$0xff]
    %v84 = vld [vmem:[#allocation5 + $0xf8] sm:$0xff]
    %v85 = vld [vmem:[#allocation5 + $0x100] sm:$0xff]
    %v86 = vld [vmem:[#allocation5 + $0x108] sm:$0xff]
    %v87 = vld [vmem:[#allocation5 + $0x110] sm:$0xff]
    %v88 = vld [vmem:[#allocation5 + $0x118] sm:$0xff]
    %v89 = vld [vmem:[#allocation7] sm:$0x1]
    %v90 = vld [vmem:[#allocation7 + $0x1] sm:$0x1]
    %v91 = vld [vmem:[#allocation7 + $0x2] sm:$0x1]
    %v92 = vld [vmem:[#allocation7 + $0x3] sm:$0x1]
    %v93 = vld [vmem:[#allocation7 + $0x4] sm:$0x1]
    %vm94 = vcmask 261120
    %v96 = vsel %vm94, %v52, 0
    %98 = vmatprep.subr.mxu0 0.0
    %99 = vmatpush1.msra.mxu0 %v53
    %100 = vmatprep.subr.mxu0 0.0
    %101 = vmatpush1.msra.mxu0 %v54
    %102 = vmatprep.subr.mxu0 0.0
    %103 = vmatpush1.msra.mxu0 %v55
    %104 = vmatprep.subr.mxu0 0.0
    %105 = vmatpush1.msra.mxu0 %v56
    %106 = vmatprep.subr.mxu0 0.0
    %107 = vmatpush1.msra.mxu0 0.0
    %108 = vmatprep.subr.mxu0 0.0
    %109 = vmatpush1.msra.mxu0 0.0
    %110 = vmatprep.subr.mxu0 0.0
    %111 = vmatpush1.msra.mxu0 0.0
    %112 = vmatprep.subr.mxu0 0.0
    %113 = vmatpush1.msra.mxu0 0.0
    %114 = vmatprep.subr.mxu0 0.0
    %115 = vmatpush1.msra.mxu0 0.0
    %116 = vmatprep.subr.mxu0 0.0
    %117 = vmatpush1.msra.mxu0 0.0
    %118 = vmatprep.subr.mxu0 0.0
    %119 = vmatpush1.msra.mxu0 0.0
    %120 = vmatprep.subr.mxu0 0.0
    %121 = vmatpush1.msra.mxu0 0.0
    %122 = vmatprep.subr.mxu0 0.0
    %123 = vmatpush1.msra.mxu0 0.0
    %124 = vmatprep.subr.mxu0 0.0
    %125 = vmatpush1.msra.mxu0 0.0
    %126 = vmatprep.subr.mxu0 0.0
    %127 = vmatpush1.msra.mxu0 0.0
    %128 = vmatprep.subr.mxu0 0.0
    %129 = vmatpush1.msra.mxu0 0.0
    %130 = vmatprep.subr.mxu0 0.0
    %131 = vmatpush1.msra.mxu0 0.0
    %132 = vmatprep.subr.mxu0 0.0
    %133 = vmatpush1.msra.mxu0 0.0
    %134 = vmatprep.subr.mxu0 0.0
    %135 = vmatpush1.msra.mxu0 0.0
    %136 = vmatprep.subr.mxu0 0.0
    %137 = vmatpush1.msra.mxu0 0.0
    %138 = vmatprep.subr.mxu0 0.0
    %139 = vmatpush1.msra.mxu0 0.0
    %140 = vmatprep.subr.mxu0 0.0
    %141 = vmatpush1.msra.mxu0 0.0
    %142 = vmatprep.subr.mxu0 0.0
    %143 = vmatpush1.msra.mxu0 0.0
    %144 = vmatprep.subr.mxu0 0.0
    %145 = vmatpush1.msra.mxu0 0.0
    %146 = vmatprep.subr.mxu0 0.0
    %147 = vmatpush1.msra.mxu0 0.0
    %148 = vmatprep.subr.mxu0 0.0
    %149 = vmatpush1.msra.mxu0 0.0
    %150 = vmatprep.subr.mxu0 0.0
    %151 = vmatpush1.msra.mxu0 0.0
    %152 = vmatprep.subr.mxu0 0.0
    %153 = vmatpush1.msra.mxu0 0.0
    %154 = vmatprep.subr.mxu0 0.0
    %155 = vmatpush1.msra.mxu0 0.0
    %156 = vmatprep.subr.mxu0 0.0
    %157 = vmatpush1.msra.mxu0 0.0
    %158 = vmatprep.subr.mxu0 0.0
    %159 = vmatpush1.msra.mxu0 0.0
    %160 = vmatprep.subr.mxu0 0.0
    %161 = vmatpush1.msra.mxu0 0.0
    %162 = vmatprep.mubr.f32.mxu0 0.0
    %163 = vmatmul.mubr.f32.gmra.mrb[0].mxu0 %v96
    %v164 = vpop.f32.mrb[0].mxu0
    %v165 = vadd.f32 0.0, %v164
    %v166 = vpop.f32.mrb[0].mxu0
    %167 = vdwg.mxu0
    %v168 = vrot.slane %v165, 4
    %v169 = vadd.f32 %v165, %v168
    %v170 = vrot.slane %v169, 2
    %v171 = vadd.f32 %v169, %v170
    %v172 = vrot.slane %v171, 1
    %v173 = vadd.f32 %v171, %v172
    %v174 = vrcp.pop 8.0
    %v175 = vmul.f32 %v173, %v174
    %v176 = vmul.f32 %v165, %v165
    %v177 = vrot.slane %v176, 4
    %v178 = vadd.f32 %v176, %v177
    %v179 = vrot.slane %v178, 2
    %v180 = vadd.f32 %v178, %v179
    %v181 = vrot.slane %v180, 1
    %v182 = vadd.f32 %v180, %v181
    %v183 = vmul.f32 %v182, %v174
    %v184 = vmul.f32 %v175, %v175
    %v185 = vsub.f32 %v183, %v184
    %v186 = vmax.f32 %v185, 0.0
    %v187 = vadd.f32 %v186, 1e-05
    %v188 = vrsqrt.pop %v187
    %v189 = vmul.f32 %v89, %v188
    %v190 = vmul.f32 %v175, %v189
    %v191 = vsub.f32 %v90, %v190
    %v192 = vlaneseq
    %v193 = vshrl.u32 %v192, 7
    %v194 = vsub.s32 0, %v193
    %v195 = vrot.slane %v189, %v194
    %v196 = vmul.f32 %v165, %v195
    %v197 = vlaneseq
    %v198 = vshrl.u32 %v197, 7
    %v199 = vsub.s32 0, %v198
    %v200 = vrot.slane %v191, %v199
    %v201 = vadd.f32 %v196, %v200
    %v202 = vmax.f32 %v201, 0.0
    %203 = vmatprep.subr.mxu0 0.0
    %204 = vmatpush1.msra.mxu0 %v57
    %205 = vmatprep.subr.mxu0 0.0
    %206 = vmatpush1.msra.mxu0 %v58
    %207 = vmatprep.subr.mxu0 0.0
    %208 = vmatpush1.msra.mxu0 %v59
    %209 = vmatprep.subr.mxu0 0.0
    %210 = vmatpush1.msra.mxu0 %v60
    %211 = vmatprep.subr.mxu0 0.0
    %212 = vmatpush1.msra.mxu0 %v61
    %213 = vmatprep.subr.mxu0 0.0
    %214 = vmatpush1.msra.mxu0 %v62
    %215 = vmatprep.subr.mxu0 0.0
    %216 = vmatpush1.msra.mxu0 %v63
    %217 = vmatprep.subr.mxu0 0.0
    %218 = vmatpush1.msra.mxu0 %v64
    %219 = vmatprep.subr.mxu0 0.0
    %220 = vmatpush1.msra.mxu0 %v65
    %221 = vmatprep.subr.mxu0 0.0
    %222 = vmatpush1.msra.mxu0 %v66
    %223 = vmatprep.subr.mxu0 0.0
    %224 = vmatpush1.msra.mxu0 %v67
    %225 = vmatprep.subr.mxu0 0.0
    %226 = vmatpush1.msra.mxu0 %v68
    %227 = vmatprep.subr.mxu0 0.0
    %228 = vmatpush1.msra.mxu0 %v69
    %229 = vmatprep.subr.mxu0 0.0
    %230 = vmatpush1.msra.mxu0 %v70
    %231 = vmatprep.subr.mxu0 0.0
    %232 = vmatpush1.msra.mxu0 %v71
    %233 = vmatprep.subr.mxu0 0.0
    %234 = vmatpush1.msra.mxu0 %v72
    %235 = vmatprep.subr.mxu0 0.0
    %236 = vmatpush1.msra.mxu0 0.0
    %237 = vmatprep.subr.mxu0 0.0
    %238 = vmatpush1.msra.mxu0 0.0
    %239 = vmatprep.subr.mxu0 0.0
    %240 = vmatpush1.msra.mxu0 0.0
    %241 = vmatprep.subr.mxu0 0.0
    %242 = vmatpush1.msra.mxu0 0.0
    %243 = vmatprep.subr.mxu0 0.0
    %244 = vmatpush1.msra.mxu0 0.0
    %245 = vmatprep.subr.mxu0 0.0
    %246 = vmatpush1.msra.mxu0 0.0
    %247 = vmatprep.subr.mxu0 0.0
    %248 = vmatpush1.msra.mxu0 0.0
    %249 = vmatprep.subr.mxu0 0.0
    %250 = vmatpush1.msra.mxu0 0.0
    %251 = vmatprep.subr.mxu0 0.0
    %252 = vmatpush1.msra.mxu0 0.0
    %253 = vmatprep.subr.mxu0 0.0
    %254 = vmatpush1.msra.mxu0 0.0
    %255 = vmatprep.subr.mxu0 0.0
    %256 = vmatpush1.msra.mxu0 0.0
    %257 = vmatprep.subr.mxu0 0.0
    %258 = vmatpush1.msra.mxu0 0.0
    %259 = vmatprep.subr.mxu0 0.0
    %260 = vmatpush1.msra.mxu0 0.0
    %261 = vmatprep.subr.mxu0 0.0
    %262 = vmatpush1.msra.mxu0 0.0
    %263 = vmatprep.subr.mxu0 0.0
    %264 = vmatpush1.msra.mxu0 0.0
    %265 = vmatprep.subr.mxu0 0.0
    %266 = vmatpush1.msra.mxu0 0.0
    %267 = vmatprep.mubr.f32.mxu0 0.0
    %268 = vmatmul.mubr.f32.gmra.mrb[0].mxu0 %v202
    %v269 = vpop.f32.mrb[0].mxu0
    %v270 = vadd.f32 0.0, %v269
    %v271 = vpop.f32.mrb[0].mxu0
    %272 = vdwg.mxu0
    %v273 = vrot.slane %v270, 4
    %v274 = vadd.f32 %v270, %v273
    %v275 = vrot.slane %v274, 2
    %v276 = vadd.f32 %v274, %v275
    %v277 = vrot.slane %v276, 1
    %v278 = vadd.f32 %v276, %v277
    %v279 = vmul.f32 %v278, %v174
    %v280 = vmul.f32 %v270, %v270
    %v281 = vrot.slane %v280, 4
    %v282 = vadd.f32 %v280, %v281
    %v283 = vrot.slane %v282, 2
    %v284 = vadd.f32 %v282, %v283
    %v285 = vrot.slane %v284, 1
    %v286 = vadd.f32 %v284, %v285
    %v287 = vmul.f32 %v286, %v174
    %v288 = vmul.f32 %v279, %v279
    %v289 = vsub.f32 %v287, %v288
    %v290 = vmax.f32 %v289, 0.0
    %v291 = vadd.f32 %v290, 1e-05
    %v292 = vrsqrt.pop %v291
    %v293 = vmul.f32 %v91, %v292
    %v294 = vmul.f32 %v279, %v293
    %v295 = vsub.f32 %v92, %v294
    %v296 = vlaneseq
    %v297 = vshrl.u32 %v296, 7
    %v298 = vsub.s32 0, %v297
    %v299 = vrot.slane %v293, %v298
    %v300 = vmul.f32 %v270, %v299
    %v301 = vlaneseq
    %v302 = vshrl.u32 %v301, 7
    %v303 = vsub.s32 0, %v302
    %v304 = vrot.slane %v295, %v303
    %v305 = vadd.f32 %v300, %v304
    %v306 = vmax.f32 %v305, 0.0
    %v307 = vlaneseq
    %v308 = vshrl.u32 %v307, 7
    %v309 = vsub.s32 0, %v308
    %v310 = vrot.slane %v93, %v309
    %311 = vmatprep.subr.mxu0 0.0
    %312 = vmatpush1.msra.mxu0 %v73
    %313 = vmatprep.subr.mxu0 0.0
    %314 = vmatpush1.msra.mxu0 %v74
    %315 = vmatprep.subr.mxu0 0.0
    %316 = vmatpush1.msra.mxu0 %v75
    %317 = vmatprep.subr.mxu0 0.0
    %318 = vmatpush1.msra.mxu0 %v76
    %319 = vmatprep.subr.mxu0 0.0
    %320 = vmatpush1.msra.mxu0 %v77
    %321 = vmatprep.subr.mxu0 0.0
    %322 = vmatpush1.msra.mxu0 %v78
    %323 = vmatprep.subr.mxu0 0.0
    %324 = vmatpush1.msra.mxu0 %v79
    %325 = vmatprep.subr.mxu0 0.0
    %326 = vmatpush1.msra.mxu0 %v80
    %327 = vmatprep.subr.mxu0 0.0
    %328 = vmatpush1.msra.mxu0 %v81
    %329 = vmatprep.subr.mxu0 0.0
    %330 = vmatpush1.msra.mxu0 %v82
    %331 = vmatprep.subr.mxu0 0.0
    %332 = vmatpush1.msra.mxu0 %v83
    %333 = vmatprep.subr.mxu0 0.0
    %334 = vmatpush1.msra.mxu0 %v84
    %335 = vmatprep.subr.mxu0 0.0
    %336 = vmatpush1.msra.mxu0 %v85
    %337 = vmatprep.subr.mxu0 0.0
    %338 = vmatpush1.msra.mxu0 %v86
    %339 = vmatprep.subr.mxu0 0.0
    %340 = vmatpush1.msra.mxu0 %v87
    %341 = vmatprep.subr.mxu0 0.0
    %342 = vmatpush1.msra.mxu0 %v88
    %343 = vmatprep.subr.mxu0 0.0
    %344 = vmatpush1.msra.mxu0 0.0
    %345 = vmatprep.subr.mxu0 0.0
    %346 = vmatpush1.msra.mxu0 0.0
    %347 = vmatprep.subr.mxu0 0.0
    %348 = vmatpush1.msra.mxu0 0.0
    %349 = vmatprep.subr.mxu0 0.0
    %350 = vmatpush1.msra.mxu0 0.0
    %351 = vmatprep.subr.mxu0 0.0
    %352 = vmatpush1.msra.mxu0 0.0
    %353 = vmatprep.subr.mxu0 0.0
    %354 = vmatpush1.msra.mxu0 0.0
    %355 = vmatprep.subr.mxu0 0.0
    %356 = vmatpush1.msra.mxu0 0.0
    %357 = vmatprep.subr.mxu0 0.0
    %358 = vmatpush1.msra.mxu0 0.0
    %359 = vmatprep.subr.mxu0 0.0
    %360 = vmatpush1.msra.mxu0 0.0
    %361 = vmatprep.subr.mxu0 0.0
    %362 = vmatpush1.msra.mxu0 0.0
    %363 = vmatprep.subr.mxu0 0.0
    %364 = vmatpush1.msra.mxu0 0.0
    %365 = vmatprep.subr.mxu0 0.0
    %366 = vmatpush1.msra.mxu0 0.0
    %367 = vmatprep.subr.mxu0 0.0
    %368 = vmatpush1.msra.mxu0 0.0
    %369 = vmatprep.subr.mxu0 0.0
    %370 = vmatpush1.msra.mxu0 0.0
    %371 = vmatprep.subr.mxu0 0.0
    %372 = vmatpush1.msra.mxu0 0.0
    %373 = vmatprep.subr.mxu0 0.0
    %374 = vmatpush1.msra.mxu0 0.0
    %375 = vmatprep.mubr.f32.mxu0 0.0
    %376 = vmatmul.mubr.f32.gmra.mrb[0].mxu0 %v306
    %v377 = vpop.f32.mrb[0].mxu0
    %v378 = vadd.f32 %v310, %v377
    %v379 = vpop.f32.mrb[0].mxu0
    %380 = vdwg.mxu0
    %381 = vst [vmem:[#allocation8] sm:$0xff] %v378
    // Predicated region
    $region26: #{tpu_custom_call.1} parent=1 // pred_check
      _
    $region27: #{tpu_custom_call.1} parent=1 // pred_check_branch
      %383 = sbr.rel (0) target = $region29
    $region28: #{tpu_custom_call.1} parent=1 // pred_region
      %s385 = ssub.s32 128, 128
      %386 = vsyncadd [#allocation4], %s385
      %s388 = sshll.u32 [#allocation8], 4
      %s389 = int_to_ptr.vmem [resolvable:$true] %s388
      %391 = dma.vmem_to_hbm [thread:$0]  %s389, 128, %s3, [#allocation4]
    $region29: #{tpu_custom_call.1} parent=1 // pred_fallthru
      _
    // Predicated region
    $region30: #{tpu_custom_call.1} parent=1 // pred_check
      _
    $region31: #{tpu_custom_call.1} parent=1 // pred_check_branch
      %393 = sbr.rel (0) target = $region33
    $region32: #{tpu_custom_call.1} parent=1 // pred_region
      %394 = dma.done [#allocation4], 128
    $region33: #{tpu_custom_call.1} parent=1 // pred_fallthru
      _
    %395 = vsyncpa [#allocation3], 1
    %396 = vsyncpa [#allocation6], 1
    %397 = vsyncpa [#allocation4], 1

</llo_original>
